<compile_context>
chip_gen: v5e
topology: v5e:2x2
jax: 0.10.0
libtpu: 0.0.40
codegen_flags: <defaults>
</compile_context>

<pallas_src>
import jax
import jax.numpy as jnp
from jax.experimental import pallas as pl
from jax.experimental.pallas import tpu as pltpu


# ----------------------------------------------------------------------------
# Helpers
# ----------------------------------------------------------------------------
def _round_up(x, m):
    return -(-x // m) * m


def _vmem_capacity_bytes():
    """Physical VMEM of the attached TPU; conservative fallback if unknown."""
    try:
        info = pltpu.get_tpu_info()
        cap = int(getattr(info, "vmem_capacity_bytes", 0) or 0)
        if cap > 0:
            return cap
    except Exception:
        pass
    return 64 << 20  # v7x-sized fallback (safe on every generation)


def _vmem_limit(need_bytes, cap_bytes):
    """Scoped-VMEM limit: enough headroom for our buffers, <= 3/4 of physical."""
    return int(max(32 << 20, min(cap_bytes * 3 // 4, need_bytes * 2)))


def _pick_tile_m(M, cin, cout_pad, out_itemsize, budget_bytes, want=4096):
    """Largest row-tile (multiple of 128) whose double-buffered VMEM use fits,
    capped so the grid keeps >= ~8 steps (keeps both v7x TensorCores busy)."""
    cin_cols = _round_up(max(cin, 1), 128)  # lane padding of the VMEM buffer

    def need(t):
        return (2 * t * cin_cols * 4              # f32 activation tile, 2 bufs
                + 2 * t * cout_pad * out_itemsize  # output tile, 2 bufs
                + (4 << 20))                       # weights/bias/compiler headroom

    tile = max(128, _round_up(want, 128))
    while tile > 128 and need(tile) > budget_bytes:
        tile //= 2
    tile = max(128, tile)
    tile = min(tile, max(128, _round_up(M, 128)))  # don't over-tile tiny problems
    eight = (M // 8) // 128 * 128                  # >= ~8 grid steps when it matters
    if eight >= 512:
        tile = min(tile, eight)
    return tile, need(tile)


# ----------------------------------------------------------------------------
# Kernel: K small MXU matmuls (one per tap) accumulated in f32 + folded bias.
# ----------------------------------------------------------------------------
def _make_kernel(K):
    def kernel(*args):
        taps = args[:K]                      # each (..., Cin) f32 activation block
        w_ref = args[K]                      # (K, Cin, Cout_pad) f32 folded weight
        b_ref = args[K + 1]                  # (1, Cout_pad)      f32 folded bias
        o_ref = args[K + 2]                  # (..., Cout_pad)    output block
        cin = taps[0].shape[-1]
        acc = None
        for k in range(K):
            xk = taps[k][...].reshape(-1, cin).astype(jnp.bfloat16)
            wk = w_ref[k].astype(jnp.bfloat16)
            d = jnp.dot(xk, wk, preferred_element_type=jnp.float32)
            acc = d if acc is None else acc + d
        y = acc + b_ref[...]
        o_ref[...] = y.reshape(o_ref.shape).astype(o_ref.dtype)
    return kernel


# ----------------------------------------------------------------------------
# Wrapper: fold params once, pick tiling, call pallas.
# ----------------------------------------------------------------------------
def unit_tcn_skip_forward(x, params, *, kernel_size=1, stride=1, eps=1e-5,
                          data_format="NCHW", out_dtype=jnp.float32,
                          tile_m=4096):
    """Inference forward of unit_tcn_skip.

    x: (N, Cin, T, V) if data_format == "NCHW" (PyTorch layout), or
       (N, T, V, Cin) if data_format == "NHWC" (saves two transpose passes).
    Returns (N, Cout, T_out, V) or (N, T_out, V, Cout) respectively.
    """
    K, S = int(kernel_size), int(stride)
    if data_format == "NCHW":
        N, Cin, T, V = x.shape
        x_nhwc = jnp.transpose(x, (0, 2, 3, 1))          # (N, T, V, Cin)
    elif data_format == "NHWC":
        N, T, V, Cin = x.shape
        x_nhwc = x
    else:
        raise ValueError(f"unknown data_format {data_format!r}")
    T_out = (T - K) // S + 1

    # ---- Fold depthwise + pointwise + BN into one (K, Cin, Cout) weight ----
    w_dw = params["w_dw"].astype(jnp.float32)            # (K, Cin)
    b_dw = params["b_dw"].astype(jnp.float32)            # (Cin,)
    w_pw = params["w_pw"].astype(jnp.float32)            # (Cin, Cout)
    b_pw = params["b_pw"].astype(jnp.float32)            # (Cout,)
    gamma = params["gamma"].astype(jnp.float32)
    beta = params["beta"].astype(jnp.float32)
    r_mean = params["running_mean"].astype(jnp.float32)
    r_var = params["running_var"].astype(jnp.float32)
    Cout = w_pw.shape[1]

    bn_scale = gamma / jnp.sqrt(r_var + eps)                         # (Cout,)
    bn_bias = beta - r_mean * bn_scale                               # (Cout,)
    # W[k, c, o] = w_dw[k, c] * w_pw[c, o] * bn_scale[o]
    w_fold = w_dw[:, :, None] * w_pw[None, :, :] * bn_scale[None, None, :]
    # b[o] = (sum_c b_dw[c] * w_pw[c, o] + b_pw[o]) * bn_scale[o] + bn_bias[o]
    b_fold = ((b_dw @ w_pw + b_pw) * bn_scale + bn_bias).reshape(1, Cout)

    Cout_pad = _round_up(Cout, 128)                       # lane-dense stores
    if Cout_pad != Cout:
        w_fold = jnp.pad(w_fold, ((0, 0), (0, 0), (0, Cout_pad - Cout)))
        b_fold = jnp.pad(b_fold, ((0, 0), (0, Cout_pad - Cout)))
    w_fold = w_fold.astype(jnp.float32)                   # (K, Cin, Cout_pad)
    b_fold = b_fold.astype(jnp.float32)                   # (1, Cout_pad)

    out_itemsize = jnp.dtype(out_dtype).itemsize
    cap = _vmem_capacity_bytes()
    kernel = _make_kernel(K)

    if K == 1 and S == 1:
        # ---- Fast path (module default): one flat (M, Cin) row-tiled matmul,
        # zero wrapper gather passes (reshape is a bitcast). ----
        M = N * T_out * V
        x_flat = x_nhwc.reshape(M, Cin)
        tile, need = _pick_tile_m(M, Cin, Cout_pad, out_itemsize,
                                  budget_bytes=cap // 2, want=tile_m)
        out_flat = pl.pallas_call(
            kernel,
            out_shape=jax.ShapeDtypeStruct((M, Cout_pad), out_dtype),
            grid_spec=pltpu.PrefetchScalarGridSpec(
                num_scalar_prefetch=0,
                grid=(pl.cdiv(M, tile),),
                in_specs=[
                    pl.BlockSpec((tile, Cin), lambda i: (i, 0)),
                    pl.BlockSpec((1, Cin, Cout_pad), lambda i: (0, 0, 0)),
                    pl.BlockSpec((1, Cout_pad), lambda i: (0, 0)),
                ],
                out_specs=pl.BlockSpec((tile, Cout_pad), lambda i: (i, 0)),
            ),
            compiler_params=pltpu.CompilerParams(
                dimension_semantics=("parallel",),
                vmem_limit_bytes=_vmem_limit(need, cap),
            ),
        )(x_flat, w_fold, b_fold)
        if Cout_pad != Cout:
            out_flat = out_flat[:, :Cout]
        out_nhwc = out_flat.reshape(N, T_out, V, Cout)
    else:
        # ---- General K/S path: in-kernel tap gather. The SAME x slab is passed
        # K times (no copy); tap k's index_map offsets the T coordinate by
        # S*t + k, so no overlapping windows are materialized in HBM. ----
        cin_cols = _round_up(Cin, 128)
        need = (2 * K * N * V * cin_cols * 4
                + 2 * N * V * Cout_pad * out_itemsize
                + 2 * K * _round_up(Cin, 8) * Cout_pad * 4
                + (4 << 20))
        tap_specs = [
            pl.BlockSpec((N, 1, V, Cin), lambda t, k=k: (0, S * t + k, 0, 0))
            for k in range(K)
        ]
        out = pl.pallas_call(
            kernel,
            out_shape=jax.ShapeDtypeStruct((N, T_out, V, Cout_pad), out_dtype),
            grid_spec=pltpu.PrefetchScalarGridSpec(
                num_scalar_prefetch=0,
                grid=(T_out,),
                in_specs=tap_specs + [
                    pl.BlockSpec((K, Cin, Cout_pad), lambda t: (0, 0, 0)),
                    pl.BlockSpec((1, Cout_pad), lambda t: (0, 0)),
                ],
                out_specs=pl.BlockSpec((N, 1, V, Cout_pad),
                                       lambda t: (0, t, 0, 0)),
            ),
            compiler_params=pltpu.CompilerParams(
                dimension_semantics=("parallel",),
                vmem_limit_bytes=_vmem_limit(need, cap),
            ),
        )(*([x_nhwc] * K), w_fold, b_fold)
        out_nhwc = out[..., :Cout] if Cout_pad != Cout else out

    if data_format == "NCHW":
        return jnp.transpose(out_nhwc, (0, 3, 1, 2))      # (N, Cout, T_out, V)
    return out_nhwc


# ----------------------------------------------------------------------------
# Synthetic params + plain-JAX reference (validation only).
# ----------------------------------------------------------------------------
def init_params(key, in_channels, out_channels, kernel_size=1):
    k1, k2, k3, k4 = jax.random.split(key, 4)
    K = kernel_size
    w_dw = 0.1 * jax.random.normal(k1, (K, in_channels), jnp.float32)
    b_dw = 0.1 * jax.random.normal(k2, (in_channels,), jnp.float32)
    w_pw = 0.1 * jax.random.normal(k3, (in_channels, out_channels), jnp.float32)
    b_pw = 0.1 * jax.random.normal(k4, (out_channels,), jnp.float32)
    return {
        "w_dw": w_dw, "b_dw": b_dw, "w_pw": w_pw, "b_pw": b_pw,
        # bn_init(bn, 1): weight=1, bias=0; fresh running stats
        "gamma": jnp.ones((out_channels,), jnp.float32),
        "beta": jnp.zeros((out_channels,), jnp.float32),
        "running_mean": jnp.zeros((out_channels,), jnp.float32),
        "running_var": jnp.ones((out_channels,), jnp.float32),
    }


def _reference(x, params, kernel_size=1, stride=1, eps=1e-5):
    N, Cin, T, V = x.shape
    K, S = kernel_size, stride
    T_out = (T - K) // S + 1
    d = jnp.zeros((N, Cin, T_out, V), jnp.float32)
    for k in range(K):
        d = d + params["w_dw"][k][None, :, None, None] * x[:, :, k:k + S * T_out:S, :]
    d = d + params["b_dw"][None, :, None, None]
    y = jnp.einsum("ncTV,co->noTV", d, params["w_pw"]) + params["b_pw"][None, :, None, None]
    scale = params["gamma"] / jnp.sqrt(params["running_var"] + eps)
    bias = params["beta"] - params["running_mean"] * scale
    return y * scale[None, :, None, None] + bias[None, :, None, None]


if __name__ == "__main__":
    key = jax.random.PRNGKey(0)
    kx, kp, kx2, kp2 = jax.random.split(key, 4)

    # Module defaults: kernel_size=1, stride=1 (fast path).
    N, Cin, Cout, T, V = 2, 4, 8, 16, 16
    x = jax.random.normal(kx, (N, Cin, T, V), jnp.float32)
    params = init_params(kp, Cin, Cout, kernel_size=1)

    out = unit_tcn_skip_forward(x, params, kernel_size=1, stride=1)
    out = jax.block_until_ready(out)
    ref = _reference(x, params, kernel_size=1, stride=1)
    assert out.shape == ref.shape
    # bf16 matmul inputs -> slightly looser tolerance than pure f32.
    assert jnp.allclose(out, ref, atol=1e-2, rtol=1e-2), \
        float(jnp.max(jnp.abs(out - ref)))

    # Exercise the K>1 / strided in-kernel tap-gather path.
    x2 = jax.random.normal(kx2, (N, Cin, T, V), jnp.float32)
    params2 = init_params(kp2, Cin, Cout, kernel_size=3)
    out2 = unit_tcn_skip_forward(x2, params2, kernel_size=3, stride=2)
    out2 = jax.block_until_ready(out2)
    ref2 = _reference(x2, params2, kernel_size=3, stride=2)
    assert out2.shape == ref2.shape
    assert jnp.allclose(out2, ref2, atol=1e-2, rtol=1e-2), \
        float(jnp.max(jnp.abs(out2 - ref2)))

    # Exercise the zero-transpose NHWC boundary + bf16 output path.
    x_nhwc = jnp.transpose(x, (0, 2, 3, 1))
    out3 = unit_tcn_skip_forward(x_nhwc, params, kernel_size=1, stride=1,
                                 data_format="NHWC", out_dtype=jnp.bfloat16)
    out3 = jax.block_until_ready(out3)
    ref3 = jnp.transpose(ref, (0, 2, 3, 1))
    assert out3.shape == ref3.shape
    assert jnp.allclose(out3.astype(jnp.float32), ref3, atol=2e-2, rtol=2e-2), \
        float(jnp.max(jnp.abs(out3.astype(jnp.float32) - ref3)))

    print("KERNEL_OK")
</pallas_src>

<mosaic_0001>
module attributes {stable_mosaic.version = 11 : i64} {
  func.func @kernel(%arg0: i32, %arg1: memref<512x4xf32, #tpu.memory_space<vmem>>, %arg2: memref<1x4x128xf32, #tpu.memory_space<vmem>>, %arg3: memref<1x128xf32, #tpu.memory_space<vmem>>, %arg4: memref<512x128xf32, #tpu.memory_space<vmem>>) attributes {dimension_semantics = [#tpu.dimension_semantics<parallel>], iteration_bounds = array<i64: 1>, scalar_prefetch = 0 : i64, scratch_operands = 0 : i64, tpu.core_type = #tpu.core_type<tc>, window_params = [{transform_indices = @transform_0, window_bounds = array<i64: 512, 4>}, {pipeline_mode = #tpu.pipeline_mode<synchronous>, transform_indices = @transform_1, window_bounds = array<i64: 1, 4, 128>}, {pipeline_mode = #tpu.pipeline_mode<synchronous>, transform_indices = @transform_2, window_bounds = array<i64: 1, 128>}, {transform_indices = @transform_3, window_bounds = array<i64: 512, 128>}]} {
    %c0 = arith.constant 0 : index
    %c0_0 = arith.constant 0 : index
    %0 = vector.load %arg1[%c0, %c0_0] : memref<512x4xf32, #tpu.memory_space<vmem>>, vector<512x4xf32>
    %1 = arith.truncf %0 : vector<512x4xf32> to vector<512x4xbf16>
    %c0_1 = arith.constant 0 : index
    %c0_2 = arith.constant 0 : index
    %c0_3 = arith.constant 0 : index
    %2 = vector.load %arg2[%c0_1, %c0_2, %c0_3] : memref<1x4x128xf32, #tpu.memory_space<vmem>>, vector<1x4x128xf32>
    %3 = vector.shape_cast %2 : vector<1x4x128xf32> to vector<4x128xf32>
    %4 = arith.truncf %3 : vector<4x128xf32> to vector<4x128xbf16>
    %cst = arith.constant dense<0.000000e+00> : vector<512x128xf32>
    %5 = tpu.matmul %1, %4, %cst {dimension_numbers = #tpu.dot_dimension_numbers<[1], [0], [0], [1], [0, 0, 1, 1], [], []>} : vector<512x4xbf16>, vector<4x128xbf16>, vector<512x128xf32> -> vector<512x128xf32>
    %c0_4 = arith.constant 0 : index
    %c0_5 = arith.constant 0 : index
    %6 = vector.load %arg3[%c0_4, %c0_5] : memref<1x128xf32, #tpu.memory_space<vmem>>, vector<1x128xf32>
    %7 = vector.broadcast %6 : vector<1x128xf32> to vector<512x128xf32>
    %8 = arith.addf %5, %7 : vector<512x128xf32>
    %c0_6 = arith.constant 0 : index
    %c0_7 = arith.constant 0 : index
    %9 = vector.load %arg4[%c0_6, %c0_7] : memref<512x128xf32, #tpu.memory_space<vmem>>, vector<512x128xf32>
    tpu.vector_store %arg4[%c0_6, %c0_7], %8 {strides = array<i32>} : memref<512x128xf32, #tpu.memory_space<vmem>>, vector<512x128xf32>,
    return
  }
  func.func @transform_0(%arg0: i32) -> (i32, i32) {
    %c0_i32 = arith.constant 0 : i32
    %c0_i32_0 = arith.constant 0 : i32
    return %arg0, %c0_i32 : i32, i32
  }
  func.func @transform_1(%arg0: i32) -> (i32, i32, i32) {
    %c0_i32 = arith.constant 0 : i32
    %c0_i32_0 = arith.constant 0 : i32
    %c0_i32_1 = arith.constant 0 : i32
    %c0_i32_2 = arith.constant 0 : i32
    return %c0_i32, %c0_i32_0, %c0_i32_1 : i32, i32, i32
  }
  func.func @transform_2(%arg0: i32) -> (i32, i32) {
    %c0_i32 = arith.constant 0 : i32
    %c0_i32_0 = arith.constant 0 : i32
    %c0_i32_1 = arith.constant 0 : i32
    return %c0_i32, %c0_i32_0 : i32, i32
  }
  func.func @transform_3(%arg0: i32) -> (i32, i32) {
    %c0_i32 = arith.constant 0 : i32
    %c0_i32_0 = arith.constant 0 : i32
    return %arg0, %c0_i32 : i32, i32
  }
}

</mosaic_0001>

<llo_original>
// kernel: tpu_custom_call.1
$region0: #{tpu_custom_call.1}
  #allocation0 [shape = 'u32[]', space=smem, size = 0x4, offset = 0x4, fixed_abs, tag = 'smem constant byte address 0x4 - core index']
  #allocation1 [shape = 'u32[72,128]{1,0:T(1,128)}', space=vmem, size = 0x9000, scoped, tag = 'internal scratch']
  %s0 = inlined_call_operand.vmem [shape: f32[512,4], index: 0, kind: input, shape index: {}]
  %s1 = inlined_call_operand.vmem [shape: f32[1,4,128], index: 1, kind: input, shape index: {}]
  %s2 = inlined_call_operand.vmem [shape: f32[1,128], index: 2, kind: input, shape index: {}]
  %s3 = inlined_call_operand.hbm [shape: f32[512,128], index: 3, kind: output, shape index: {}]
  %s4 = sld [smem:[#allocation0]]
  $region22: #{tpu_custom_call.1} parent=0
    _
  %s6 = ssub.s32 1, %s4
  %s7 = scalar_select 0, %s6, %s4
  $region1: #{tpu_custom_call.1} parent=0
    #allocation2 [shape = 'u8[262144]{0}', space=vmem, size = 0x40000, scoped, tag = 'output window, operand 0, single buffered']
    #allocation3 [shape = 's32[1]{0}', space=sflag, size = 0x4, scoped, tag = 'scoped memory for tpu_custom_call.1']
    %8 = vsyncpa [#allocation3], 0
    // Predicated region
    $region2: #{tpu_custom_call.1} parent=1 // pred_check
      _
    $region3: #{tpu_custom_call.1} parent=1 // pred_check_branch
      %10 = sbr.rel (0) target = $region5
    $region4: #{tpu_custom_call.1} parent=1 // pred_region
      _
    $region5: #{tpu_custom_call.1} parent=1 // pred_fallthru
      _
    // Predicated region
    $region6: #{tpu_custom_call.1} parent=1 // pred_check
      _
    $region7: #{tpu_custom_call.1} parent=1 // pred_check_branch
      %12 = sbr.rel (0) target = $region9
    $region8: #{tpu_custom_call.1} parent=1 // pred_region
      _
    $region9: #{tpu_custom_call.1} parent=1 // pred_fallthru
      _
    // Predicated region
    $region10: #{tpu_custom_call.1} parent=1 // pred_check
      _
    $region11: #{tpu_custom_call.1} parent=1 // pred_check_branch
      %14 = sbr.rel (0) target = $region13
    $region12: #{tpu_custom_call.1} parent=1 // pred_region
      _
    $region13: #{tpu_custom_call.1} parent=1 // pred_fallthru
      _
    %v16 = vld [vmem:[%s0] sm:$0xff]
    %v17 = vld [vmem:[%s0 + $0x8] sm:$0xff]
    %v18 = vld [vmem:[%s0 + $0x10] sm:$0xff]
    %v19 = vld [vmem:[%s0 + $0x18] sm:$0xff]
    %v20 = vld [vmem:[%s0 + $0x20] sm:$0xff]
    %v21 = vld [vmem:[%s0 + $0x28] sm:$0xff]
    %v22 = vld [vmem:[%s0 + $0x30] sm:$0xff]
    %v23 = vld [vmem:[%s0 + $0x38] sm:$0xff]
    %v24 = vld [vmem:[%s0 + $0x40] sm:$0xff]
    %v25 = vld [vmem:[%s0 + $0x48] sm:$0xff]
    %v26 = vld [vmem:[%s0 + $0x50] sm:$0xff]
    %v27 = vld [vmem:[%s0 + $0x58] sm:$0xff]
    %v28 = vld [vmem:[%s0 + $0x60] sm:$0xff]
    %v29 = vld [vmem:[%s0 + $0x68] sm:$0xff]
    %v30 = vld [vmem:[%s0 + $0x70] sm:$0xff]
    %v31 = vld [vmem:[%s0 + $0x78] sm:$0xff]
    %v32 = vld [vmem:[%s0 + $0x80] sm:$0xff]
    %v33 = vld [vmem:[%s0 + $0x88] sm:$0xff]
    %v34 = vld [vmem:[%s0 + $0x90] sm:$0xff]
    %v35 = vld [vmem:[%s0 + $0x98] sm:$0xff]
    %v36 = vld [vmem:[%s0 + $0xa0] sm:$0xff]
    %v37 = vld [vmem:[%s0 + $0xa8] sm:$0xff]
    %v38 = vld [vmem:[%s0 + $0xb0] sm:$0xff]
    %v39 = vld [vmem:[%s0 + $0xb8] sm:$0xff]
    %v40 = vld [vmem:[%s0 + $0xc0] sm:$0xff]
    %v41 = vld [vmem:[%s0 + $0xc8] sm:$0xff]
    %v42 = vld [vmem:[%s0 + $0xd0] sm:$0xff]
    %v43 = vld [vmem:[%s0 + $0xd8] sm:$0xff]
    %v44 = vld [vmem:[%s0 + $0xe0] sm:$0xff]
    %v45 = vld [vmem:[%s0 + $0xe8] sm:$0xff]
    %v46 = vld [vmem:[%s0 + $0xf0] sm:$0xff]
    %v47 = vld [vmem:[%s0 + $0xf8] sm:$0xff]
    %v48 = vld [vmem:[%s0 + $0x100] sm:$0xff]
    %v49 = vld [vmem:[%s0 + $0x108] sm:$0xff]
    %v50 = vld [vmem:[%s0 + $0x110] sm:$0xff]
    %v51 = vld [vmem:[%s0 + $0x118] sm:$0xff]
    %v52 = vld [vmem:[%s0 + $0x120] sm:$0xff]
    %v53 = vld [vmem:[%s0 + $0x128] sm:$0xff]
    %v54 = vld [vmem:[%s0 + $0x130] sm:$0xff]
    %v55 = vld [vmem:[%s0 + $0x138] sm:$0xff]
    %v56 = vld [vmem:[%s0 + $0x140] sm:$0xff]
    %v57 = vld [vmem:[%s0 + $0x148] sm:$0xff]
    %v58 = vld [vmem:[%s0 + $0x150] sm:$0xff]
    %v59 = vld [vmem:[%s0 + $0x158] sm:$0xff]
    %v60 = vld [vmem:[%s0 + $0x160] sm:$0xff]
    %v61 = vld [vmem:[%s0 + $0x168] sm:$0xff]
    %v62 = vld [vmem:[%s0 + $0x170] sm:$0xff]
    %v63 = vld [vmem:[%s0 + $0x178] sm:$0xff]
    %v64 = vld [vmem:[%s0 + $0x180] sm:$0xff]
    %v65 = vld [vmem:[%s0 + $0x188] sm:$0xff]
    %v66 = vld [vmem:[%s0 + $0x190] sm:$0xff]
    %v67 = vld [vmem:[%s0 + $0x198] sm:$0xff]
    %v68 = vld [vmem:[%s0 + $0x1a0] sm:$0xff]
    %v69 = vld [vmem:[%s0 + $0x1a8] sm:$0xff]
    %v70 = vld [vmem:[%s0 + $0x1b0] sm:$0xff]
    %v71 = vld [vmem:[%s0 + $0x1b8] sm:$0xff]
    %v72 = vld [vmem:[%s0 + $0x1c0] sm:$0xff]
    %v73 = vld [vmem:[%s0 + $0x1c8] sm:$0xff]
    %v74 = vld [vmem:[%s0 + $0x1d0] sm:$0xff]
    %v75 = vld [vmem:[%s0 + $0x1d8] sm:$0xff]
    %v76 = vld [vmem:[%s0 + $0x1e0] sm:$0xff]
    %v77 = vld [vmem:[%s0 + $0x1e8] sm:$0xff]
    %v78 = vld [vmem:[%s0 + $0x1f0] sm:$0xff]
    %v79 = vld [vmem:[%s0 + $0x1f8] sm:$0xff]
    %v80 = vpack.c.bf16 %v17, %v16
    %v81 = vpack.c.bf16 %v19, %v18
    %v82 = vpack.c.bf16 %v21, %v20
    %v83 = vpack.c.bf16 %v23, %v22
    %v84 = vpack.c.bf16 %v25, %v24
    %v85 = vpack.c.bf16 %v27, %v26
    %v86 = vpack.c.bf16 %v29, %v28
    %v87 = vpack.c.bf16 %v31, %v30
    %v88 = vpack.c.bf16 %v33, %v32
    %v89 = vpack.c.bf16 %v35, %v34
    %v90 = vpack.c.bf16 %v37, %v36
    %v91 = vpack.c.bf16 %v39, %v38
    %v92 = vpack.c.bf16 %v41, %v40
    %v93 = vpack.c.bf16 %v43, %v42
    %v94 = vpack.c.bf16 %v45, %v44
    %v95 = vpack.c.bf16 %v47, %v46
    %v96 = vpack.c.bf16 %v49, %v48
    %v97 = vpack.c.bf16 %v51, %v50
    %v98 = vpack.c.bf16 %v53, %v52
    %v99 = vpack.c.bf16 %v55, %v54
    %v100 = vpack.c.bf16 %v57, %v56
    %v101 = vpack.c.bf16 %v59, %v58
    %v102 = vpack.c.bf16 %v61, %v60
    %v103 = vpack.c.bf16 %v63, %v62
    %v104 = vpack.c.bf16 %v65, %v64
    %v105 = vpack.c.bf16 %v67, %v66
    %v106 = vpack.c.bf16 %v69, %v68
    %v107 = vpack.c.bf16 %v71, %v70
    %v108 = vpack.c.bf16 %v73, %v72
    %v109 = vpack.c.bf16 %v75, %v74
    %v110 = vpack.c.bf16 %v77, %v76
    %v111 = vpack.c.bf16 %v79, %v78
    %v112 = vld [vmem:[%s1] sm:$0xf]
    %v113 = vpack.c.bf16 %v112, %v112
    %v114 = vld [vmem:[%s2] sm:$0x1]
    %v116 = vperm.slane %v114, 0
    %vm118 = vcmask 31744
    %v120 = vsel %vm118, %v80, 0
    %v123 = vsel %vm118, %v81, 0
    %v126 = vsel %vm118, %v82, 0
    %v129 = vsel %vm118, %v83, 0
    %v132 = vsel %vm118, %v84, 0
    %v135 = vsel %vm118, %v85, 0
    %v138 = vsel %vm118, %v86, 0
    %v141 = vsel %vm118, %v87, 0
    %v144 = vsel %vm118, %v88, 0
    %v147 = vsel %vm118, %v89, 0
    %v150 = vsel %vm118, %v90, 0
    %v153 = vsel %vm118, %v91, 0
    %v156 = vsel %vm118, %v92, 0
    %v159 = vsel %vm118, %v93, 0
    %v162 = vsel %vm118, %v94, 0
    %v165 = vsel %vm118, %v95, 0
    %v168 = vsel %vm118, %v96, 0
    %v171 = vsel %vm118, %v97, 0
    %v174 = vsel %vm118, %v98, 0
    %v177 = vsel %vm118, %v99, 0
    %v180 = vsel %vm118, %v100, 0
    %v183 = vsel %vm118, %v101, 0
    %v186 = vsel %vm118, %v102, 0
    %v189 = vsel %vm118, %v103, 0
    %v192 = vsel %vm118, %v104, 0
    %v195 = vsel %vm118, %v105, 0
    %v198 = vsel %vm118, %v106, 0
    %v201 = vsel %vm118, %v107, 0
    %v204 = vsel %vm118, %v108, 0
    %v207 = vsel %vm118, %v109, 0
    %v210 = vsel %vm118, %v110, 0
    %v213 = vsel %vm118, %v111, 0
    %vm215 = vcmask 1041408
    %v217 = vsel %vm215, %v113, 0
    %219 = vmatpush.bf16.msra.mxu0 0
    %220 = vmatpush.bf16.msra.mxu0 0
    %221 = vmatpush.bf16.msra.mxu0 0
    %222 = vmatpush.bf16.msra.mxu0 0
    %223 = vmatpush.bf16.msra.mxu0 0
    %224 = vmatpush.bf16.msra.mxu0 0
    %225 = vmatpush.bf16.msra.mxu0 0
    %226 = vmatpush.bf16.msra.mxu0 %v217
    %227 = vmatmul.bf16.gmra.mxu0 %v120
    %v228 = vpop.f32.mrf.mxu0
    %v229 = vadd.f32 %v116, %v228
    %v230 = vpop.f32.mrf.mxu0
    %v231 = vadd.f32 %v116, %v230
    %232 = vmatmul.bf16.gmra.mxu0 %v123
    %v233 = vpop.f32.mrf.mxu0
    %v234 = vadd.f32 %v116, %v233
    %v235 = vpop.f32.mrf.mxu0
    %v236 = vadd.f32 %v116, %v235
    %237 = vmatmul.bf16.gmra.mxu0 %v126
    %v238 = vpop.f32.mrf.mxu0
    %v239 = vadd.f32 %v116, %v238
    %v240 = vpop.f32.mrf.mxu0
    %v241 = vadd.f32 %v116, %v240
    %242 = vmatmul.bf16.gmra.mxu0 %v129
    %v243 = vpop.f32.mrf.mxu0
    %v244 = vadd.f32 %v116, %v243
    %v245 = vpop.f32.mrf.mxu0
    %v246 = vadd.f32 %v116, %v245
    %247 = vmatmul.bf16.gmra.mxu0 %v132
    %v248 = vpop.f32.mrf.mxu0
    %v249 = vadd.f32 %v116, %v248
    %v250 = vpop.f32.mrf.mxu0
    %v251 = vadd.f32 %v116, %v250
    %252 = vmatmul.bf16.gmra.mxu0 %v135
    %v253 = vpop.f32.mrf.mxu0
    %v254 = vadd.f32 %v116, %v253
    %v255 = vpop.f32.mrf.mxu0
    %v256 = vadd.f32 %v116, %v255
    %257 = vmatmul.bf16.gmra.mxu0 %v138
    %v258 = vpop.f32.mrf.mxu0
    %v259 = vadd.f32 %v116, %v258
    %v260 = vpop.f32.mrf.mxu0
    %v261 = vadd.f32 %v116, %v260
    %262 = vmatmul.bf16.gmra.mxu0 %v141
    %v263 = vpop.f32.mrf.mxu0
    %v264 = vadd.f32 %v116, %v263
    %v265 = vpop.f32.mrf.mxu0
    %v266 = vadd.f32 %v116, %v265
    %267 = vmatmul.bf16.gmra.mxu0 %v144
    %v268 = vpop.f32.mrf.mxu0
    %v269 = vadd.f32 %v116, %v268
    %v270 = vpop.f32.mrf.mxu0
    %v271 = vadd.f32 %v116, %v270
    %272 = vmatmul.bf16.gmra.mxu0 %v147
    %v273 = vpop.f32.mrf.mxu0
    %v274 = vadd.f32 %v116, %v273
    %v275 = vpop.f32.mrf.mxu0
    %v276 = vadd.f32 %v116, %v275
    %277 = vmatmul.bf16.gmra.mxu0 %v150
    %v278 = vpop.f32.mrf.mxu0
    %v279 = vadd.f32 %v116, %v278
    %v280 = vpop.f32.mrf.mxu0
    %v281 = vadd.f32 %v116, %v280
    %282 = vmatmul.bf16.gmra.mxu0 %v153
    %v283 = vpop.f32.mrf.mxu0
    %v284 = vadd.f32 %v116, %v283
    %v285 = vpop.f32.mrf.mxu0
    %v286 = vadd.f32 %v116, %v285
    %287 = vmatmul.bf16.gmra.mxu0 %v156
    %v288 = vpop.f32.mrf.mxu0
    %v289 = vadd.f32 %v116, %v288
    %v290 = vpop.f32.mrf.mxu0
    %v291 = vadd.f32 %v116, %v290
    %292 = vmatmul.bf16.gmra.mxu0 %v159
    %v293 = vpop.f32.mrf.mxu0
    %v294 = vadd.f32 %v116, %v293
    %v295 = vpop.f32.mrf.mxu0
    %v296 = vadd.f32 %v116, %v295
    %297 = vmatmul.bf16.gmra.mxu0 %v162
    %v298 = vpop.f32.mrf.mxu0
    %v299 = vadd.f32 %v116, %v298
    %v300 = vpop.f32.mrf.mxu0
    %v301 = vadd.f32 %v116, %v300
    %302 = vmatmul.bf16.gmra.mxu0 %v165
    %v303 = vpop.f32.mrf.mxu0
    %v304 = vadd.f32 %v116, %v303
    %v305 = vpop.f32.mrf.mxu0
    %v306 = vadd.f32 %v116, %v305
    %307 = vmatmul.bf16.gmra.mxu0 %v168
    %v308 = vpop.f32.mrf.mxu0
    %v309 = vadd.f32 %v116, %v308
    %v310 = vpop.f32.mrf.mxu0
    %v311 = vadd.f32 %v116, %v310
    %312 = vmatmul.bf16.gmra.mxu0 %v171
    %v313 = vpop.f32.mrf.mxu0
    %v314 = vadd.f32 %v116, %v313
    %v315 = vpop.f32.mrf.mxu0
    %v316 = vadd.f32 %v116, %v315
    %317 = vmatmul.bf16.gmra.mxu0 %v174
    %v318 = vpop.f32.mrf.mxu0
    %v319 = vadd.f32 %v116, %v318
    %v320 = vpop.f32.mrf.mxu0
    %v321 = vadd.f32 %v116, %v320
    %322 = vmatmul.bf16.gmra.mxu0 %v177
    %v323 = vpop.f32.mrf.mxu0
    %v324 = vadd.f32 %v116, %v323
    %v325 = vpop.f32.mrf.mxu0
    %v326 = vadd.f32 %v116, %v325
    %327 = vmatmul.bf16.gmra.mxu0 %v180
    %v328 = vpop.f32.mrf.mxu0
    %v329 = vadd.f32 %v116, %v328
    %v330 = vpop.f32.mrf.mxu0
    %v331 = vadd.f32 %v116, %v330
    %332 = vmatmul.bf16.gmra.mxu0 %v183
    %v333 = vpop.f32.mrf.mxu0
    %v334 = vadd.f32 %v116, %v333
    %v335 = vpop.f32.mrf.mxu0
    %v336 = vadd.f32 %v116, %v335
    %337 = vmatmul.bf16.gmra.mxu0 %v186
    %v338 = vpop.f32.mrf.mxu0
    %v339 = vadd.f32 %v116, %v338
    %v340 = vpop.f32.mrf.mxu0
    %v341 = vadd.f32 %v116, %v340
    %342 = vmatmul.bf16.gmra.mxu0 %v189
    %v343 = vpop.f32.mrf.mxu0
    %v344 = vadd.f32 %v116, %v343
    %v345 = vpop.f32.mrf.mxu0
    %v346 = vadd.f32 %v116, %v345
    %347 = vmatmul.bf16.gmra.mxu0 %v192
    %v348 = vpop.f32.mrf.mxu0
    %v349 = vadd.f32 %v116, %v348
    %v350 = vpop.f32.mrf.mxu0
    %v351 = vadd.f32 %v116, %v350
    %352 = vmatmul.bf16.gmra.mxu0 %v195
    %v353 = vpop.f32.mrf.mxu0
    %v354 = vadd.f32 %v116, %v353
    %v355 = vpop.f32.mrf.mxu0
    %v356 = vadd.f32 %v116, %v355
    %357 = vmatmul.bf16.gmra.mxu0 %v198
    %v358 = vpop.f32.mrf.mxu0
    %v359 = vadd.f32 %v116, %v358
    %v360 = vpop.f32.mrf.mxu0
    %v361 = vadd.f32 %v116, %v360
    %362 = vmatmul.bf16.gmra.mxu0 %v201
    %v363 = vpop.f32.mrf.mxu0
    %v364 = vadd.f32 %v116, %v363
    %v365 = vpop.f32.mrf.mxu0
    %v366 = vadd.f32 %v116, %v365
    %367 = vmatmul.bf16.gmra.mxu0 %v204
    %v368 = vpop.f32.mrf.mxu0
    %v369 = vadd.f32 %v116, %v368
    %v370 = vpop.f32.mrf.mxu0
    %v371 = vadd.f32 %v116, %v370
    %372 = vmatmul.bf16.gmra.mxu0 %v207
    %v373 = vpop.f32.mrf.mxu0
    %v374 = vadd.f32 %v116, %v373
    %v375 = vpop.f32.mrf.mxu0
    %v376 = vadd.f32 %v116, %v375
    %377 = vmatmul.bf16.gmra.mxu0 %v210
    %v378 = vpop.f32.mrf.mxu0
    %v379 = vadd.f32 %v116, %v378
    %v380 = vpop.f32.mrf.mxu0
    %v381 = vadd.f32 %v116, %v380
    %382 = vmatmul.bf16.gmra.mxu0 %v213
    %v383 = vpop.f32.mrf.mxu0
    %v384 = vadd.f32 %v116, %v383
    %v385 = vpop.f32.mrf.mxu0
    %v386 = vadd.f32 %v116, %v385
    %387 = vdwg.mxu0
    %388 = vst [vmem:[#allocation2] sm:$0xff] %v229
    %389 = vst [vmem:[#allocation2 + $0x8] sm:$0xff] %v231
    %390 = vst [vmem:[#allocation2 + $0x10] sm:$0xff] %v234
    %391 = vst [vmem:[#allocation2 + $0x18] sm:$0xff] %v236
    %392 = vst [vmem:[#allocation2 + $0x20] sm:$0xff] %v239
    %393 = vst [vmem:[#allocation2 + $0x28] sm:$0xff] %v241
    %394 = vst [vmem:[#allocation2 + $0x30] sm:$0xff] %v244
    %395 = vst [vmem:[#allocation2 + $0x38] sm:$0xff] %v246
    %396 = vst [vmem:[#allocation2 + $0x40] sm:$0xff] %v249
    %397 = vst [vmem:[#allocation2 + $0x48] sm:$0xff] %v251
    %398 = vst [vmem:[#allocation2 + $0x50] sm:$0xff] %v254
    %399 = vst [vmem:[#allocation2 + $0x58] sm:$0xff] %v256
    %400 = vst [vmem:[#allocation2 + $0x60] sm:$0xff] %v259
    %401 = vst [vmem:[#allocation2 + $0x68] sm:$0xff] %v261
    %402 = vst [vmem:[#allocation2 + $0x70] sm:$0xff] %v264
    %403 = vst [vmem:[#allocation2 + $0x78] sm:$0xff] %v266
    %404 = vst [vmem:[#allocation2 + $0x80] sm:$0xff] %v269
    %405 = vst [vmem:[#allocation2 + $0x88] sm:$0xff] %v271
    %406 = vst [vmem:[#allocation2 + $0x90] sm:$0xff] %v274
    %407 = vst [vmem:[#allocation2 + $0x98] sm:$0xff] %v276
    %408 = vst [vmem:[#allocation2 + $0xa0] sm:$0xff] %v279
    %409 = vst [vmem:[#allocation2 + $0xa8] sm:$0xff] %v281
    %410 = vst [vmem:[#allocation2 + $0xb0] sm:$0xff] %v284
    %411 = vst [vmem:[#allocation2 + $0xb8] sm:$0xff] %v286
    %412 = vst [vmem:[#allocation2 + $0xc0] sm:$0xff] %v289
    %413 = vst [vmem:[#allocation2 + $0xc8] sm:$0xff] %v291
    %414 = vst [vmem:[#allocation2 + $0xd0] sm:$0xff] %v294
    %415 = vst [vmem:[#allocation2 + $0xd8] sm:$0xff] %v296
    %416 = vst [vmem:[#allocation2 + $0xe0] sm:$0xff] %v299
    %417 = vst [vmem:[#allocation2 + $0xe8] sm:$0xff] %v301
    %418 = vst [vmem:[#allocation2 + $0xf0] sm:$0xff] %v304
    %419 = vst [vmem:[#allocation2 + $0xf8] sm:$0xff] %v306
    %420 = vst [vmem:[#allocation2 + $0x100] sm:$0xff] %v309
    %421 = vst [vmem:[#allocation2 + $0x108] sm:$0xff] %v311
    %422 = vst [vmem:[#allocation2 + $0x110] sm:$0xff] %v314
    %423 = vst [vmem:[#allocation2 + $0x118] sm:$0xff] %v316
    %424 = vst [vmem:[#allocation2 + $0x120] sm:$0xff] %v319
    %425 = vst [vmem:[#allocation2 + $0x128] sm:$0xff] %v321
    %426 = vst [vmem:[#allocation2 + $0x130] sm:$0xff] %v324
    %427 = vst [vmem:[#allocation2 + $0x138] sm:$0xff] %v326
    %428 = vst [vmem:[#allocation2 + $0x140] sm:$0xff] %v329
    %429 = vst [vmem:[#allocation2 + $0x148] sm:$0xff] %v331
    %430 = vst [vmem:[#allocation2 + $0x150] sm:$0xff] %v334
    %431 = vst [vmem:[#allocation2 + $0x158] sm:$0xff] %v336
    %432 = vst [vmem:[#allocation2 + $0x160] sm:$0xff] %v339
    %433 = vst [vmem:[#allocation2 + $0x168] sm:$0xff] %v341
    %434 = vst [vmem:[#allocation2 + $0x170] sm:$0xff] %v344
    %435 = vst [vmem:[#allocation2 + $0x178] sm:$0xff] %v346
    %436 = vst [vmem:[#allocation2 + $0x180] sm:$0xff] %v349
    %437 = vst [vmem:[#allocation2 + $0x188] sm:$0xff] %v351
    %438 = vst [vmem:[#allocation2 + $0x190] sm:$0xff] %v354
    %439 = vst [vmem:[#allocation2 + $0x198] sm:$0xff] %v356
    %440 = vst [vmem:[#allocation2 + $0x1a0] sm:$0xff] %v359
    %441 = vst [vmem:[#allocation2 + $0x1a8] sm:$0xff] %v361
    %442 = vst [vmem:[#allocation2 + $0x1b0] sm:$0xff] %v364
    %443 = vst [vmem:[#allocation2 + $0x1b8] sm:$0xff] %v366
    %444 = vst [vmem:[#allocation2 + $0x1c0] sm:$0xff] %v369
    %445 = vst [vmem:[#allocation2 + $0x1c8] sm:$0xff] %v371
    %446 = vst [vmem:[#allocation2 + $0x1d0] sm:$0xff] %v374
    %447 = vst [vmem:[#allocation2 + $0x1d8] sm:$0xff] %v376
    %448 = vst [vmem:[#allocation2 + $0x1e0] sm:$0xff] %v379
    %449 = vst [vmem:[#allocation2 + $0x1e8] sm:$0xff] %v381
    %450 = vst [vmem:[#allocation2 + $0x1f0] sm:$0xff] %v384
    %451 = vst [vmem:[#allocation2 + $0x1f8] sm:$0xff] %v386
    // Predicated region
    $region14: #{tpu_custom_call.1} parent=1 // pred_check
      _
    $region15: #{tpu_custom_call.1} parent=1 // pred_check_branch
      %453 = sbr.rel (0) target = $region17
    $region16: #{tpu_custom_call.1} parent=1 // pred_region
      %455 = vsyncadd [#allocation3], 0
      %s456 = sshll.u32 [#allocation2], 4
      %s457 = int_to_ptr.vmem [resolvable:$true] %s456
      %s458 = sshll.u32 %s3, 4
      %s459 = int_to_ptr.hbm [resolvable:$true] %s458
      %464 = dma.vmem_to_hbm [thread:$0]  %s457, 8192, %s459, [#allocation3], 128, 128, 8
    $region17: #{tpu_custom_call.1} parent=1 // pred_fallthru
      _
    // Predicated region
    $region18: #{tpu_custom_call.1} parent=1 // pred_check
      _
    $region19: #{tpu_custom_call.1} parent=1 // pred_check_branch
      %466 = sbr.rel (0) target = $region21
    $region20: #{tpu_custom_call.1} parent=1 // pred_region
      %468 = dma.done [#allocation3], 8192
    $region21: #{tpu_custom_call.1} parent=1 // pred_fallthru
      _
    %469 = vsyncpa [#allocation3], 1

</llo_original>
